<compile_context>
chip_gen: v7x
topology: tpu7x:2x2x1
jax: 0.10.0
libtpu: 0.0.40
codegen_flags: <defaults>
</compile_context>

<pallas_src>
import functools

import jax
import jax.numpy as jnp
from jax.experimental import pallas as pl
from jax.experimental.pallas import tpu as pltpu


def _round_up(x, m):
    return ((x + m - 1) // m) * m


def _sublane_packing(dtype):
    """Rows per packed sublane group: 8 (4-byte), 16 (2-byte), 32 (1-byte)."""
    return 32 // jnp.dtype(dtype).itemsize


def prepare_concat_linear_params(w_t, bias, d1):
    """One-time (init-time) parameter prep, hoisted out of the per-call path.

    Splits Linear.weight.T along K so that
        concat(x1f, x2f) @ W == x1f @ W[:D1] + x2f @ W[D1:]
    and zero-pads the output feature dim F to a multiple of 128 so every output
    store in the kernel is a full, unmasked lane-dense vst.

    Returns (w1, w2, bias2d) with shapes (D1, Fp), (D2, Fp), (1, Fp).
    """
    k, f = w_t.shape
    assert 0 < d1 < k, "d1 must split the weight K dimension"
    fp = _round_up(f, 128)
    w1 = w_t[:d1, :]
    w2 = w_t[d1:, :]
    if fp != f:
        w1 = jnp.pad(w1, ((0, 0), (0, fp - f)))
        w2 = jnp.pad(w2, ((0, 0), (0, fp - f)))
        bias = jnp.pad(bias, (0, fp - f))
    return w1, w2, bias.reshape(1, fp)


def _concat_linear_kernel(x1_ref, x2_ref, w1_ref, w2_ref, b_ref, o_ref):
    """Fused concat(dim=1) + Linear without materializing the concat.

    x1_ref : (TM, D1)  flattened first-input batch tile
    x2_ref : (TM, D2)  flattened second-input batch tile
    w1_ref : (D1, Fp)  K-range [0, D1)      of Linear.weight.T (whole, in VMEM)
    w2_ref : (D2, Fp)  K-range [D1, D1+D2)  of Linear.weight.T (whole, in VMEM)
    b_ref  : (1, Fp)   bias (whole, in VMEM)
    o_ref  : (TM, Fp)  output tile (lane-dense: Fp % 128 == 0)
    """
    acc = jnp.dot(x1_ref[...], w1_ref[...], preferred_element_type=jnp.float32)
    acc = acc + jnp.dot(x2_ref[...], w2_ref[...],
                        preferred_element_type=jnp.float32)
    o_ref[...] = (acc + b_ref[...].astype(jnp.float32)).astype(o_ref.dtype)


# Below this many matmul FLOPs the pallas_call is pure launch overhead; use XLA.
_PALLAS_MIN_FLOPS = 1 << 22  # ~4 MFLOP


@functools.partial(jax.jit,
                   static_argnames=("out_features", "block_m", "force_pallas"))
def concat_forward(x1, x2, w1, w2, b2, *, out_features, block_m=512,
                   force_pallas=False):
    """Mirror of Concat.forward((x1, x2)) with self.main == nn.Linear.

    x1, x2 : (B, ...) tensors (flattened per-sample, like torch .view(B, -1))
    w1, w2, b2 : output of prepare_concat_linear_params (pre-split, F-padded)
    out_features : true (unpadded) Linear output width
    """
    B = x1.shape[0]
    assert x2.shape[0] == B, "batch dims must match"

    # Per-sample flatten (identical to torch .view(i.shape[0], -1)).
    x1f = x1.reshape(B, -1)
    x2f = x2.reshape(B, -1)

    d1, fp = w1.shape
    d2 = w2.shape[0]
    assert x1f.shape[1] == d1 and x2f.shape[1] == d2, \
        "weight K split must match flattened input widths"

    # torch.cat dtype promotion semantics for mixed-dtype inputs.
    act_dtype = jnp.promote_types(x1f.dtype, x2f.dtype)
    x1f = x1f.astype(act_dtype)
    x2f = x2f.astype(act_dtype)
    out_dtype = jnp.promote_types(act_dtype, w1.dtype)

    matmul_flops = 2 * B * (d1 + d2) * fp

    # Tiny-shape fast path: skip the kernel when it is pure launch overhead.
    if (not force_pallas) and matmul_flops < _PALLAS_MIN_FLOPS:
        out = (jnp.dot(x1f, w1, preferred_element_type=jnp.float32)
               + jnp.dot(x2f, w2, preferred_element_type=jnp.float32)
               + b2.astype(jnp.float32))
        return out[:, :out_features].astype(out_dtype)

    # Batch tiling: align to the dtype's sublane packing (8/16/32), never pad
    # to a full tile multiple; the ragged last tile is masked by Pallas.
    packing = _sublane_packing(act_dtype)
    b_aligned = _round_up(B, packing)
    tm = min(block_m, b_aligned)
    # Give the second TensorCore (v7x megacore) something to do when possible.
    if (b_aligned + tm - 1) // tm < 2 and b_aligned >= 2 * packing:
        tm = _round_up((b_aligned + 1) // 2, packing)
    if b_aligned != B:  # at most one sublane-packing group of padded rows
        x1f = jnp.pad(x1f, ((0, b_aligned - B), (0, 0)))
        x2f = jnp.pad(x2f, ((0, b_aligned - B), (0, 0)))

    grid = (pl.cdiv(b_aligned, tm),)

    act_bytes = jnp.dtype(act_dtype).itemsize
    w_bytes = jnp.dtype(w1.dtype).itemsize
    out_bytes = jnp.dtype(out_dtype).itemsize
    weight_bytes = (d1 + d2 + 1) * fp * w_bytes        # single-buffered slabs
    vmem_needed = (weight_bytes
                   + 2 * tm * (d1 + d2) * act_bytes    # double-buffered acts
                   + 2 * tm * fp * out_bytes)          # double-buffered output
    vmem_limit = int(min(max(vmem_needed + (4 << 20), 32 << 20), 64 << 20))

    cost = pl.CostEstimate(
        flops=2 * b_aligned * (d1 + d2) * fp,
        transcendentals=0,
        bytes_accessed=(b_aligned * (d1 + d2) * act_bytes
                        + weight_bytes
                        + b_aligned * fp * out_bytes))

    out = pl.pallas_call(
        _concat_linear_kernel,
        out_shape=jax.ShapeDtypeStruct((b_aligned, fp), out_dtype),
        grid_spec=pltpu.PrefetchScalarGridSpec(
            num_scalar_prefetch=0,
            grid=grid,
            in_specs=[
                pl.BlockSpec((tm, d1), lambda i: (i, 0)),   # x1 batch tile
                pl.BlockSpec((tm, d2), lambda i: (i, 0)),   # x2 batch tile
                # Grid-invariant params: whole-array VMEM residency,
                # single-buffered (no per-step DMA, half the footprint).
                pl.BlockSpec(memory_space=pltpu.MemorySpace.VMEM),  # w1
                pl.BlockSpec(memory_space=pltpu.MemorySpace.VMEM),  # w2
                pl.BlockSpec(memory_space=pltpu.MemorySpace.VMEM),  # bias
            ],
            out_specs=pl.BlockSpec((tm, fp), lambda i: (i, 0)),
        ),
        compiler_params=pltpu.CompilerParams(
            dimension_semantics=("parallel",),
            vmem_limit_bytes=vmem_limit),
        cost_estimate=cost,
    )(x1f, x2f, w1, w2, b2)

    # Strip batch / lane padding.
    return out[:B, :out_features]


if __name__ == "__main__":
    key = jax.random.PRNGKey(0)
    k1, k2, kw, kb = jax.random.split(key, 4)

    # Small shapes consistent with the module's forward:
    #   input 1: image-like NCHW tensor, input 2: flat feature vector.
    B, C, H, W = 2, 4, 8, 8          # -> D1 = 256
    D2 = 32                          # -> concat width = 288
    F_OUT = 64                       # self.main = nn.Linear(288, 64)

    x1 = jax.random.normal(k1, (B, C, H, W), dtype=jnp.float32)
    x2 = jax.random.normal(k2, (B, D2), dtype=jnp.float32)

    D1 = C * H * W
    # Deterministic synthetic Linear params (weight stored transposed).
    w_t = jax.random.normal(kw, (D1 + D2, F_OUT), dtype=jnp.float32) * 0.05
    bias = jax.random.normal(kb, (F_OUT,), dtype=jnp.float32) * 0.05

    # One-time parameter prep (hoisted out of the hot path).
    w1, w2, b2 = prepare_concat_linear_params(w_t, bias, D1)

    # Force the Pallas path so the kernel is actually exercised at this size.
    out = concat_forward(x1, x2, w1, w2, b2, out_features=F_OUT,
                         force_pallas=True)
    out = jax.block_until_ready(out)

    # Pure-JAX reference of the PyTorch semantics.
    ref = (jnp.concatenate([x1.reshape(B, -1), x2.reshape(B, -1)], axis=1)
           @ w_t + bias)
    assert out.shape == (B, F_OUT)
    assert jnp.allclose(out, ref, atol=1e-4, rtol=1e-4), "mismatch vs reference"

    # Auto-dispatch path (XLA fast path at these tiny shapes) must agree too.
    out_auto = jax.block_until_ready(
        concat_forward(x1, x2, w1, w2, b2, out_features=F_OUT))
    assert jnp.allclose(out_auto, ref, atol=1e-4, rtol=1e-4), \
        "fast-path mismatch vs reference"

    print("KERNEL_OK")
</pallas_src>

<mosaic_0001>
module attributes {stable_mosaic.version = 11 : i64} {
  func.func @_concat_linear_kernel(%arg0: i32, %arg1: memref<8x256xf32, #tpu.memory_space<vmem>>, %arg2: memref<8x32xf32, #tpu.memory_space<vmem>>, %arg3: memref<256x128xf32, #tpu.memory_space<vmem>>, %arg4: memref<32x128xf32, #tpu.memory_space<vmem>>, %arg5: memref<1x128xf32, #tpu.memory_space<vmem>>, %arg6: memref<8x128xf32, #tpu.memory_space<vmem>>) attributes {dimension_semantics = [#tpu.dimension_semantics<parallel>], iteration_bounds = array<i64: 1>, scalar_prefetch = 0 : i64, scratch_operands = 0 : i64, tpu.core_type = #tpu.core_type<tc>, window_params = [{transform_indices = @transform_0, window_bounds = array<i64: 8, 256>}, {transform_indices = @transform_1, window_bounds = array<i64: 8, 32>}, {pipeline_mode = #tpu.pipeline_mode<synchronous>, transform_indices = @transform_2, window_bounds = array<i64: 256, 128>}, {pipeline_mode = #tpu.pipeline_mode<synchronous>, transform_indices = @transform_3, window_bounds = array<i64: 32, 128>}, {pipeline_mode = #tpu.pipeline_mode<synchronous>, transform_indices = @transform_4, window_bounds = array<i64: 1, 128>}, {transform_indices = @transform_5, window_bounds = array<i64: 8, 128>}]} {
    %c0 = arith.constant 0 : index
    %c0_0 = arith.constant 0 : index
    %0 = vector.load %arg1[%c0, %c0_0] : memref<8x256xf32, #tpu.memory_space<vmem>>, vector<8x256xf32>
    %c0_1 = arith.constant 0 : index
    %c0_2 = arith.constant 0 : index
    %1 = vector.load %arg3[%c0_1, %c0_2] : memref<256x128xf32, #tpu.memory_space<vmem>>, vector<256x128xf32>
    %cst = arith.constant dense<0.000000e+00> : vector<8x128xf32>
    %2 = tpu.matmul %0, %1, %cst {dimension_numbers = #tpu.dot_dimension_numbers<[1], [0], [0], [1], [0, 0, 1, 1], [], []>} : vector<8x256xf32>, vector<256x128xf32>, vector<8x128xf32> -> vector<8x128xf32>
    %c0_3 = arith.constant 0 : index
    %c0_4 = arith.constant 0 : index
    %3 = vector.load %arg2[%c0_3, %c0_4] : memref<8x32xf32, #tpu.memory_space<vmem>>, vector<8x32xf32>
    %c0_5 = arith.constant 0 : index
    %c0_6 = arith.constant 0 : index
    %4 = vector.load %arg4[%c0_5, %c0_6] : memref<32x128xf32, #tpu.memory_space<vmem>>, vector<32x128xf32>
    %cst_7 = arith.constant dense<0.000000e+00> : vector<8x128xf32>
    %5 = tpu.matmul %3, %4, %cst_7 {dimension_numbers = #tpu.dot_dimension_numbers<[1], [0], [0], [1], [0, 0, 1, 1], [], []>} : vector<8x32xf32>, vector<32x128xf32>, vector<8x128xf32> -> vector<8x128xf32>
    %6 = arith.addf %2, %5 : vector<8x128xf32>
    %c0_8 = arith.constant 0 : index
    %c0_9 = arith.constant 0 : index
    %7 = vector.load %arg5[%c0_8, %c0_9] : memref<1x128xf32, #tpu.memory_space<vmem>>, vector<1x128xf32>
    %8 = vector.broadcast %7 : vector<1x128xf32> to vector<8x128xf32>
    %9 = arith.addf %6, %8 : vector<8x128xf32>
    %c0_10 = arith.constant 0 : index
    %c0_11 = arith.constant 0 : index
    %10 = vector.load %arg6[%c0_10, %c0_11] : memref<8x128xf32, #tpu.memory_space<vmem>>, vector<8x128xf32>
    tpu.vector_store %arg6[%c0_10, %c0_11], %9 {strides = array<i32>} : memref<8x128xf32, #tpu.memory_space<vmem>>, vector<8x128xf32>,
    return
  }
  func.func @transform_0(%arg0: i32) -> (i32, i32) {
    %c0_i32 = arith.constant 0 : i32
    %c0_i32_0 = arith.constant 0 : i32
    return %arg0, %c0_i32 : i32, i32
  }
  func.func @transform_1(%arg0: i32) -> (i32, i32) {
    %c0_i32 = arith.constant 0 : i32
    %c0_i32_0 = arith.constant 0 : i32
    return %arg0, %c0_i32 : i32, i32
  }
  func.func @transform_2(%arg0: i32) -> (i32, i32) {
    %c0_i32 = arith.constant 0 : i32
    %c0_i32_0 = arith.constant 0 : i32
    %c0_i32_1 = arith.constant 0 : i32
    return %c0_i32, %c0_i32_0 : i32, i32
  }
  func.func @transform_3(%arg0: i32) -> (i32, i32) {
    %c0_i32 = arith.constant 0 : i32
    %c0_i32_0 = arith.constant 0 : i32
    %c0_i32_1 = arith.constant 0 : i32
    return %c0_i32, %c0_i32_0 : i32, i32
  }
  func.func @transform_4(%arg0: i32) -> (i32, i32) {
    %c0_i32 = arith.constant 0 : i32
    %c0_i32_0 = arith.constant 0 : i32
    %c0_i32_1 = arith.constant 0 : i32
    return %c0_i32, %c0_i32_0 : i32, i32
  }
  func.func @transform_5(%arg0: i32) -> (i32, i32) {
    %c0_i32 = arith.constant 0 : i32
    %c0_i32_0 = arith.constant 0 : i32
    return %arg0, %c0_i32 : i32, i32
  }
}

</mosaic_0001>

<llo_original>
// kernel: concat_forward.1
$region0: #{concat_forward.1}
  #allocation0 [shape = 'u32[]', space=smem, size = 0x4, offset = 0x4, fixed_abs, tag = 'smem constant byte address 0x4 - core index']
  #allocation1 [shape = 'u32[144,128]{1,0:T(1,128)}', space=vmem, size = 0x12000, scoped, tag = 'internal scratch']
  %s0 = inlined_call_operand.vmem [shape: f32[8,256], index: 0, kind: input, shape index: {}]
  %s1 = inlined_call_operand.vmem [shape: f32[8,32], index: 1, kind: input, shape index: {}]
  %s2 = inlined_call_operand.hbm [shape: f32[256,128], index: 2, kind: input, shape index: {}]
  %s3 = inlined_call_operand.vmem [shape: f32[32,128], index: 3, kind: input, shape index: {}]
  %s4 = inlined_call_operand.vmem [shape: f32[1,128], index: 4, kind: input, shape index: {}]
  %s5 = inlined_call_operand.vmem [shape: f32[8,128], index: 5, kind: output, shape index: {}]
  %s6 = sld [smem:[#allocation0]]
  $region34: #{concat_forward.1} parent=0
    _
  %s8 = ssub.s32 1, %s6
  %s9 = scalar_select 0, %s8, %s6
  $region1: #{concat_forward.1} parent=0
    #allocation2 [shape = 'u8[131072]{0}', space=vmem, size = 0x20000, scoped, tag = 'input window, operand 2, single buffered']
    #allocation3 [shape = 's32[1]{0}', space=sflag, size = 0x4, scoped, tag = 'scoped memory for concat_forward.1']
    %10 = vsyncpa [#allocation3], 0
    // Predicated region
    $region2: #{concat_forward.1} parent=1 // pred_check
      _
    $region3: #{concat_forward.1} parent=1 // pred_check_branch
      %12 = sbr.rel (0) target = $region5
    $region4: #{concat_forward.1} parent=1 // pred_region
      _
    $region5: #{concat_forward.1} parent=1 // pred_fallthru
      _
    // Predicated region
    $region6: #{concat_forward.1} parent=1 // pred_check
      _
    $region7: #{concat_forward.1} parent=1 // pred_check_branch
      %14 = sbr.rel (0) target = $region9
    $region8: #{concat_forward.1} parent=1 // pred_region
      _
    $region9: #{concat_forward.1} parent=1 // pred_fallthru
      _
    // Predicated region
    $region10: #{concat_forward.1} parent=1 // pred_check
      _
    $region11: #{concat_forward.1} parent=1 // pred_check_branch
      %16 = sbr.rel (0) target = $region13
    $region12: #{concat_forward.1} parent=1 // pred_region
      %s18 = ssub.s32 4096, 4096
      %19 = vsyncadd [#allocation3], %s18
      %s20 = sshll.u32 [#allocation2], 4
      %s21 = int_to_ptr.vmem [resolvable:$true] %s20
      %26 = dma.hbm_to_vmem [thread:$0]  %s2, 4096, %s21, [#allocation3], 128, 128, 8
    $region13: #{concat_forward.1} parent=1 // pred_fallthru
      _
    // Predicated region
    $region14: #{concat_forward.1} parent=1 // pred_check
      _
    $region15: #{concat_forward.1} parent=1 // pred_check_branch
      %28 = sbr.rel (0) target = $region17
    $region16: #{concat_forward.1} parent=1 // pred_region
      _
    $region17: #{concat_forward.1} parent=1 // pred_fallthru
      _
    // Predicated region
    $region18: #{concat_forward.1} parent=1 // pred_check
      _
    $region19: #{concat_forward.1} parent=1 // pred_check_branch
      %30 = sbr.rel (0) target = $region21
    $region20: #{concat_forward.1} parent=1 // pred_region
      _
    $region21: #{concat_forward.1} parent=1 // pred_fallthru
      _
    // Predicated region
    $region22: #{concat_forward.1} parent=1 // pred_check
      _
    $region23: #{concat_forward.1} parent=1 // pred_check_branch
      %32 = sbr.rel (0) target = $region25
    $region24: #{concat_forward.1} parent=1 // pred_region
      %33 = dma.done [#allocation3], 4096
    $region25: #{concat_forward.1} parent=1 // pred_fallthru
      _
    %v34 = vld [vmem:[%s0] sm:$0xff]
    %v35 = vld [vmem:[%s0 + $0x8] sm:$0xff]
    %v36 = vld [vmem:[#allocation2] sm:$0xff]
    %v37 = vld [vmem:[#allocation2 + $0x8] sm:$0xff]
    %v38 = vld [vmem:[#allocation2 + $0x10] sm:$0xff]
    %v39 = vld [vmem:[#allocation2 + $0x18] sm:$0xff]
    %v40 = vld [vmem:[#allocation2 + $0x20] sm:$0xff]
    %v41 = vld [vmem:[#allocation2 + $0x28] sm:$0xff]
    %v42 = vld [vmem:[#allocation2 + $0x30] sm:$0xff]
    %v43 = vld [vmem:[#allocation2 + $0x38] sm:$0xff]
    %v44 = vld [vmem:[#allocation2 + $0x40] sm:$0xff]
    %v45 = vld [vmem:[#allocation2 + $0x48] sm:$0xff]
    %v46 = vld [vmem:[#allocation2 + $0x50] sm:$0xff]
    %v47 = vld [vmem:[#allocation2 + $0x58] sm:$0xff]
    %v48 = vld [vmem:[#allocation2 + $0x60] sm:$0xff]
    %v49 = vld [vmem:[#allocation2 + $0x68] sm:$0xff]
    %v50 = vld [vmem:[#allocation2 + $0x70] sm:$0xff]
    %v51 = vld [vmem:[#allocation2 + $0x78] sm:$0xff]
    %v52 = vld [vmem:[#allocation2 + $0x80] sm:$0xff]
    %v53 = vld [vmem:[#allocation2 + $0x88] sm:$0xff]
    %v54 = vld [vmem:[#allocation2 + $0x90] sm:$0xff]
    %v55 = vld [vmem:[#allocation2 + $0x98] sm:$0xff]
    %v56 = vld [vmem:[#allocation2 + $0xa0] sm:$0xff]
    %v57 = vld [vmem:[#allocation2 + $0xa8] sm:$0xff]
    %v58 = vld [vmem:[#allocation2 + $0xb0] sm:$0xff]
    %v59 = vld [vmem:[#allocation2 + $0xb8] sm:$0xff]
    %v60 = vld [vmem:[#allocation2 + $0xc0] sm:$0xff]
    %v61 = vld [vmem:[#allocation2 + $0xc8] sm:$0xff]
    %v62 = vld [vmem:[#allocation2 + $0xd0] sm:$0xff]
    %v63 = vld [vmem:[#allocation2 + $0xd8] sm:$0xff]
    %v64 = vld [vmem:[#allocation2 + $0xe0] sm:$0xff]
    %v65 = vld [vmem:[#allocation2 + $0xe8] sm:$0xff]
    %v66 = vld [vmem:[#allocation2 + $0xf0] sm:$0xff]
    %v67 = vld [vmem:[#allocation2 + $0xf8] sm:$0xff]
    %v68 = vld [vmem:[%s1] sm:$0xff]
    %v69 = vld [vmem:[%s3] sm:$0xff]
    %v70 = vld [vmem:[%s3 + $0x8] sm:$0xff]
    %v71 = vld [vmem:[%s3 + $0x10] sm:$0xff]
    %v72 = vld [vmem:[%s3 + $0x18] sm:$0xff]
    %vm73 = vcmask 261120
    %v75 = vsel %vm73, %v68, 0
    %77 = vmatprep.subr.mxu0 0.0
    %78 = vmatpush1.msra.mxu0 %v69
    %79 = vmatprep.subr.mxu0 0.0
    %80 = vmatpush1.msra.mxu0 %v70
    %81 = vmatprep.subr.mxu0 0.0
    %82 = vmatpush1.msra.mxu0 %v71
    %83 = vmatprep.subr.mxu0 0.0
    %84 = vmatpush1.msra.mxu0 %v72
    %85 = vmatprep.subr.mxu0 0.0
    %86 = vmatpush1.msra.mxu0 0.0
    %87 = vmatprep.subr.mxu0 0.0
    %88 = vmatpush1.msra.mxu0 0.0
    %89 = vmatprep.subr.mxu0 0.0
    %90 = vmatpush1.msra.mxu0 0.0
    %91 = vmatprep.subr.mxu0 0.0
    %92 = vmatpush1.msra.mxu0 0.0
    %93 = vmatprep.subr.mxu0 0.0
    %94 = vmatpush1.msra.mxu0 0.0
    %95 = vmatprep.subr.mxu0 0.0
    %96 = vmatpush1.msra.mxu0 0.0
    %97 = vmatprep.subr.mxu0 0.0
    %98 = vmatpush1.msra.mxu0 0.0
    %99 = vmatprep.subr.mxu0 0.0
    %100 = vmatpush1.msra.mxu0 0.0
    %101 = vmatprep.subr.mxu0 0.0
    %102 = vmatpush1.msra.mxu0 0.0
    %103 = vmatprep.subr.mxu0 0.0
    %104 = vmatpush1.msra.mxu0 0.0
    %105 = vmatprep.subr.mxu0 0.0
    %106 = vmatpush1.msra.mxu0 0.0
    %107 = vmatprep.subr.mxu0 0.0
    %108 = vmatpush1.msra.mxu0 0.0
    %109 = vmatprep.subr.mxu0 0.0
    %110 = vmatpush1.msra.mxu0 0.0
    %111 = vmatprep.subr.mxu0 0.0
    %112 = vmatpush1.msra.mxu0 0.0
    %113 = vmatprep.subr.mxu0 0.0
    %114 = vmatpush1.msra.mxu0 0.0
    %115 = vmatprep.subr.mxu0 0.0
    %116 = vmatpush1.msra.mxu0 0.0
    %117 = vmatprep.subr.mxu0 0.0
    %118 = vmatpush1.msra.mxu0 0.0
    %119 = vmatprep.subr.mxu0 0.0
    %120 = vmatpush1.msra.mxu0 0.0
    %121 = vmatprep.subr.mxu0 0.0
    %122 = vmatpush1.msra.mxu0 0.0
    %123 = vmatprep.subr.mxu0 0.0
    %124 = vmatpush1.msra.mxu0 0.0
    %125 = vmatprep.subr.mxu0 0.0
    %126 = vmatpush1.msra.mxu0 0.0
    %127 = vmatprep.subr.mxu0 0.0
    %128 = vmatpush1.msra.mxu0 0.0
    %129 = vmatprep.subr.mxu0 0.0
    %130 = vmatpush1.msra.mxu0 0.0
    %131 = vmatprep.subr.mxu0 0.0
    %132 = vmatpush1.msra.mxu0 0.0
    %133 = vmatprep.subr.mxu0 0.0
    %134 = vmatpush1.msra.mxu0 0.0
    %135 = vmatprep.subr.mxu0 0.0
    %136 = vmatpush1.msra.mxu0 0.0
    %137 = vmatprep.subr.mxu0 0.0
    %138 = vmatpush1.msra.mxu0 0.0
    %139 = vmatprep.subr.mxu0 0.0
    %140 = vmatpush1.msra.mxu0 0.0
    %141 = vmatprep.mubr.f32.mxu0 0.0
    %142 = vmatmul.mubr.f32.gmra.mrb[0].mxu0 %v75
    %v143 = vpop.f32.mrb[0].mxu0
    %v144 = vadd.f32 0.0, %v143
    %v145 = vpop.f32.mrb[0].mxu0
    %146 = vdwg.mxu0
    %147 = vmatprep.subr.mxu0 0.0
    %148 = vmatpush1.msra.mxu0 %v36
    %149 = vmatprep.subr.mxu0 0.0
    %150 = vmatpush1.msra.mxu0 %v37
    %151 = vmatprep.subr.mxu0 0.0
    %152 = vmatpush1.msra.mxu0 %v38
    %153 = vmatprep.subr.mxu0 0.0
    %154 = vmatpush1.msra.mxu0 %v39
    %155 = vmatprep.subr.mxu0 0.0
    %156 = vmatpush1.msra.mxu0 %v40
    %157 = vmatprep.subr.mxu0 0.0
    %158 = vmatpush1.msra.mxu0 %v41
    %159 = vmatprep.subr.mxu0 0.0
    %160 = vmatpush1.msra.mxu0 %v42
    %161 = vmatprep.subr.mxu0 0.0
    %162 = vmatpush1.msra.mxu0 %v43
    %163 = vmatprep.subr.mxu0 0.0
    %164 = vmatpush1.msra.mxu0 %v44
    %165 = vmatprep.subr.mxu0 0.0
    %166 = vmatpush1.msra.mxu0 %v45
    %167 = vmatprep.subr.mxu0 0.0
    %168 = vmatpush1.msra.mxu0 %v46
    %169 = vmatprep.subr.mxu0 0.0
    %170 = vmatpush1.msra.mxu0 %v47
    %171 = vmatprep.subr.mxu0 0.0
    %172 = vmatpush1.msra.mxu0 %v48
    %173 = vmatprep.subr.mxu0 0.0
    %174 = vmatpush1.msra.mxu0 %v49
    %175 = vmatprep.subr.mxu0 0.0
    %176 = vmatpush1.msra.mxu0 %v50
    %177 = vmatprep.subr.mxu0 0.0
    %178 = vmatpush1.msra.mxu0 %v51
    %179 = vmatprep.subr.mxu0 0.0
    %180 = vmatpush1.msra.mxu0 %v52
    %181 = vmatprep.subr.mxu0 0.0
    %182 = vmatpush1.msra.mxu0 %v53
    %183 = vmatprep.subr.mxu0 0.0
    %184 = vmatpush1.msra.mxu0 %v54
    %185 = vmatprep.subr.mxu0 0.0
    %186 = vmatpush1.msra.mxu0 %v55
    %187 = vmatprep.subr.mxu0 0.0
    %188 = vmatpush1.msra.mxu0 %v56
    %189 = vmatprep.subr.mxu0 0.0
    %190 = vmatpush1.msra.mxu0 %v57
    %191 = vmatprep.subr.mxu0 0.0
    %192 = vmatpush1.msra.mxu0 %v58
    %193 = vmatprep.subr.mxu0 0.0
    %194 = vmatpush1.msra.mxu0 %v59
    %195 = vmatprep.subr.mxu0 0.0
    %196 = vmatpush1.msra.mxu0 %v60
    %197 = vmatprep.subr.mxu0 0.0
    %198 = vmatpush1.msra.mxu0 %v61
    %199 = vmatprep.subr.mxu0 0.0
    %200 = vmatpush1.msra.mxu0 %v62
    %201 = vmatprep.subr.mxu0 0.0
    %202 = vmatpush1.msra.mxu0 %v63
    %203 = vmatprep.subr.mxu0 0.0
    %204 = vmatpush1.msra.mxu0 %v64
    %205 = vmatprep.subr.mxu0 0.0
    %206 = vmatpush1.msra.mxu0 %v65
    %207 = vmatprep.subr.mxu0 0.0
    %208 = vmatpush1.msra.mxu0 %v66
    %209 = vmatprep.subr.mxu0 0.0
    %210 = vmatpush1.msra.mxu0 %v67
    %211 = vmatprep.mubr.f32.mxu0 %v35
    %212 = vmatmul.mubr.f32.gmra.mrb[0].mxu0 %v34
    %v213 = vpop.f32.mrb[0].mxu0
    %v214 = vadd.f32 %v144, %v213
    %v215 = vpop.f32.mrb[0].mxu0
    %216 = vdwg.mxu0
    %v217 = vld [vmem:[%s4] sm:$0x1]
    %v219 = vlaneseq
    %v220 = vshrl.u32 %v219, 7
    %v221 = vsub.s32 0, %v220
    %v222 = vrot.slane %v217, %v221
    %v224 = vadd.f32 %v214, %v222
    %225 = vst [vmem:[%s5] sm:$0xff] %v224
    // Predicated region
    $region26: #{concat_forward.1} parent=1 // pred_check
      _
    $region27: #{concat_forward.1} parent=1 // pred_check_branch
      %227 = sbr.rel (0) target = $region29
    $region28: #{concat_forward.1} parent=1 // pred_region
      _
    $region29: #{concat_forward.1} parent=1 // pred_fallthru
      _
    // Predicated region
    $region30: #{concat_forward.1} parent=1 // pred_check
      _
    $region31: #{concat_forward.1} parent=1 // pred_check_branch
      %229 = sbr.rel (0) target = $region33
    $region32: #{concat_forward.1} parent=1 // pred_region
      _
    $region33: #{concat_forward.1} parent=1 // pred_fallthru
      _
    %230 = vsyncpa [#allocation3], 1

</llo_original>
